<compile_context>
chip_gen: v7x
topology: tpu7x:2x2x1
jax: 0.10.0
libtpu: 0.0.40
codegen_flags: <defaults>
</compile_context>

<pallas_src>
import functools

import jax
import jax.numpy as jnp
from jax.experimental import pallas as pl
from jax.experimental.pallas import tpu as pltpu

_LANE = 128        # vreg lane width: keep feature dims lane-dense
_ROW_ALIGN = 16    # bf16 packs 2 rows/sublane -> batch tiles multiple of 16
COMPUTE_DTYPE = jnp.bfloat16   # MXU input dtype; accumulation stays float32
_VMEM_LIMIT_BYTES = 48 * 1024 * 1024   # safe on v7x (64 MiB/TC) with headroom


def _round_up(x, m):
    return ((x + m - 1) // m) * m


def _mlp_fused_kernel(*refs, num_layers):
    """Fused MLP for one batch tile.

    refs = (x, w0, b0, w1, b1, ..., w_{L-1}, b_{L-1}, out)
      x  : (tb, d_in)      input dtype (cast to bf16 in-kernel)
      w_i: (d_i, d_{i+1})  bf16  (already transposed to (In, Out) and padded)
      b_i: (1, d_{i+1})    f32
      out: (tb, d_out)
    """
    x_ref = refs[0]
    o_ref = refs[1 + 2 * num_layers]

    h = x_ref[...].astype(COMPUTE_DTYPE)                  # bf16 activation
    for i in range(num_layers):
        w_ref = refs[1 + 2 * i]
        b_ref = refs[2 + 2 * i]
        acc = jnp.dot(h, w_ref[...], preferred_element_type=jnp.float32)
        acc = acc + b_ref[...]                            # f32 epilogue
        if i < num_layers - 1:
            # ReLU; Dropout(p=0.5) is identity in eval mode.
            # TODO(synk): training-mode dropout would build the mask in-kernel
            #             with pltpu.prng_seed / pltpu.prng_random_bits.
            h = jnp.maximum(acc, 0.0).astype(COMPUTE_DTYPE)   # stays resident
        else:
            o_ref[...] = acc.astype(o_ref.dtype)          # single HBM writeback


def init_mlp_params(key, input_dim, hidden_dim, output_dim, num_layers):
    """Deterministic init matching nn.Linear: weight (out, in), bias (out,)."""
    dims = []
    if num_layers == 1:
        dims.append((input_dim, output_dim))
    else:
        dims.append((input_dim, hidden_dim))
        for _ in range(num_layers - 2):
            dims.append((hidden_dim, hidden_dim))
        dims.append((hidden_dim, output_dim))

    params = []
    for fan_in, fan_out in dims:
        key, kw, kb = jax.random.split(key, 3)
        bound = 1.0 / (fan_in ** 0.5)   # PyTorch Linear default init range
        w = jax.random.uniform(kw, (fan_out, fan_in), jnp.float32, -bound, bound)
        b = jax.random.uniform(kb, (fan_out,), jnp.float32, -bound, bound)
        params.append((w, b))
    return params


def prepare_params(params):
    """One-time param prep: transpose to (In, Out), zero-pad feature dims to
    128-lane multiples, cast weights to the MXU compute dtype. Biases stay f32.
    Zero padding keeps the math exact (padded columns produce 0 after ReLU and
    feed zero rows of the next weight)."""
    prepared = []
    for w, b in params:
        out_f, in_f = w.shape
        in_p = _round_up(in_f, _LANE)
        out_p = _round_up(out_f, _LANE)
        w_t = jnp.zeros((in_p, out_p), COMPUTE_DTYPE)
        w_t = w_t.at[:in_f, :out_f].set(jnp.transpose(w).astype(COMPUTE_DTYPE))
        b_p = jnp.zeros((1, out_p), jnp.float32)
        b_p = b_p.at[0, :out_f].set(b.astype(jnp.float32))
        prepared.append((w_t, b_p))
    return prepared


def _choose_batch_tile(B, max_tile):
    """Pick a 16-aligned batch tile that fills the MXU, bounds batch-padding
    waste (<~12.5%), and prefers >= 2 grid steps (v7x megacore)."""
    b_aligned = _round_up(max(B, 1), _ROW_ALIGN)
    tb = _ROW_ALIGN
    for cand in (512, 256, 128, 64, 32, 16):
        if cand > max_tile or cand > b_aligned:
            continue
        b_pad = _round_up(B, cand)
        if (b_pad - B) * 8 <= b_pad:          # <= 12.5% padded rows
            tb = cand
            break
    # Prefer at least 2 grid iterations so both v7x TensorCores get work.
    if _round_up(B, tb) // tb < 2 and tb > _ROW_ALIGN:
        half = max(_ROW_ALIGN, _round_up(tb // 2, _ROW_ALIGN))
        if _round_up(B, half) // half >= 2:
            tb = half
    return tb


def _resident_spec(shape):
    """BlockSpec for a grid-invariant (weights/bias) block: single-buffered,
    since its index_map is constant across the grid."""
    try:
        return pl.BlockSpec(shape, lambda i: (0, 0),
                            pipeline_mode=pl.Buffered(1))
    except TypeError:   # older JAX without pipeline_mode on BlockSpec
        return pl.BlockSpec(shape, lambda i: (0, 0))


@functools.partial(jax.jit, static_argnames=("output_dim", "batch_tile"))
def mlp_forward(x, prepared, output_dim, batch_tile=256):
    """Forward pass of the MLP (eval mode) in a single fused Pallas kernel."""
    B, in_f = x.shape
    num_layers = len(prepared)
    d_in = prepared[0][0].shape[0]    # padded input width
    d_out = prepared[-1][0].shape[1]  # padded output width

    # Batch tiling: 16-row aligned tile; padded batch divisible by the tile.
    tb = _choose_batch_tile(B, batch_tile)
    B_pad = _round_up(B, tb)
    grid = (B_pad // tb,)

    # Skip the HBM pad/copy round-trip when the activation is already aligned;
    # the f32->bf16 cast happens in-kernel on the loaded tile.
    if (B_pad != B) or (d_in != in_f):
        x_p = jnp.zeros((B_pad, d_in), COMPUTE_DTYPE)
        x_p = x_p.at[:B, :in_f].set(x.astype(COMPUTE_DTYPE))
    else:
        x_p = x

    in_specs = [pl.BlockSpec((tb, d_in), lambda i: (i, 0))]
    flat_inputs = [x_p]
    for w_t, b_p in prepared:
        in_specs.append(_resident_spec(w_t.shape))
        in_specs.append(_resident_spec(b_p.shape))
        flat_inputs.extend([w_t, b_p])

    # Advisory cost hint for XLA's scheduler.
    flops = 2 * B_pad * sum(int(w.shape[0]) * int(w.shape[1])
                            for w, _ in prepared)
    bytes_accessed = (
        x_p.size * x_p.dtype.itemsize
        + sum(w.size * w.dtype.itemsize + b.size * b.dtype.itemsize
              for w, b in prepared)
        + B_pad * d_out * jnp.dtype(x.dtype).itemsize)
    # TODO(synk): d_out padding to 128 inflates final writeback when
    #             output_dim << 128; negligible here but could use a bf16
    #             output or tighter padding for huge batches.

    out_p = pl.pallas_call(
        functools.partial(_mlp_fused_kernel, num_layers=num_layers),
        out_shape=jax.ShapeDtypeStruct((B_pad, d_out), x.dtype),
        grid_spec=pltpu.PrefetchScalarGridSpec(
            num_scalar_prefetch=0,
            grid=grid,
            in_specs=in_specs,
            out_specs=pl.BlockSpec((tb, d_out), lambda i: (i, 0)),
            scratch_shapes=[],
        ),
        compiler_params=pltpu.CompilerParams(
            # Batch-tile axis is independent -> megacore-shardable on v7x.
            dimension_semantics=("parallel",),
            vmem_limit_bytes=_VMEM_LIMIT_BYTES,
        ),
        cost_estimate=pl.CostEstimate(flops=flops, transcendentals=0,
                                      bytes_accessed=bytes_accessed),
    )(*flat_inputs)

    return out_p[:B, :output_dim]


if __name__ == "__main__":
    # Small shapes consistent with the module.
    batch = 8
    input_dim = 16
    hidden_dim = 32
    output_dim = 8
    num_layers = 3

    key = jax.random.PRNGKey(0)
    key, kx = jax.random.split(key)
    x = jax.random.normal(kx, (batch, input_dim), jnp.float32)

    params = init_mlp_params(key, input_dim, hidden_dim, output_dim, num_layers)
    prepared = prepare_params(params)   # one-time transpose / pad / cast

    out = mlp_forward(x, prepared, output_dim=output_dim)
    out = jax.block_until_ready(out)
    assert out.shape == (batch, output_dim), out.shape

    # Pure-JAX f32 reference (eval-mode dropout = identity).
    h_ref = x
    for i, (w, b) in enumerate(params):
        h_ref = h_ref @ w.T + b
        if i != len(params) - 1:
            h_ref = jnp.maximum(h_ref, 0.0)

    # bf16 matmul inputs -> loosen tolerance vs the f32 reference.
    max_err = float(jnp.max(jnp.abs(out - h_ref)))
    assert jnp.allclose(out, h_ref, atol=2e-2, rtol=2e-2), max_err

    print("KERNEL_OK")
</pallas_src>

<mosaic_0001>
module attributes {stable_mosaic.version = 11 : i64} {
  func.func @_mlp_fused_kernel(%arg0: i32, %arg1: memref<16x128xbf16, #tpu.memory_space<vmem>>, %arg2: memref<128x128xbf16, #tpu.memory_space<vmem>>, %arg3: memref<1x128xf32, #tpu.memory_space<vmem>>, %arg4: memref<128x128xbf16, #tpu.memory_space<vmem>>, %arg5: memref<1x128xf32, #tpu.memory_space<vmem>>, %arg6: memref<128x128xbf16, #tpu.memory_space<vmem>>, %arg7: memref<1x128xf32, #tpu.memory_space<vmem>>, %arg8: memref<16x128xf32, #tpu.memory_space<vmem>>) attributes {dimension_semantics = [#tpu.dimension_semantics<parallel>], iteration_bounds = array<i64: 1>, scalar_prefetch = 0 : i64, scratch_operands = 0 : i64, tpu.core_type = #tpu.core_type<tc>, window_params = [{transform_indices = @transform_0, window_bounds = array<i64: 16, 128>}, {pipeline_mode = #tpu.pipeline_mode<synchronous>, transform_indices = @transform_1, window_bounds = array<i64: 128, 128>}, {pipeline_mode = #tpu.pipeline_mode<synchronous>, transform_indices = @transform_2, window_bounds = array<i64: 1, 128>}, {pipeline_mode = #tpu.pipeline_mode<synchronous>, transform_indices = @transform_3, window_bounds = array<i64: 128, 128>}, {pipeline_mode = #tpu.pipeline_mode<synchronous>, transform_indices = @transform_4, window_bounds = array<i64: 1, 128>}, {pipeline_mode = #tpu.pipeline_mode<synchronous>, transform_indices = @transform_5, window_bounds = array<i64: 128, 128>}, {pipeline_mode = #tpu.pipeline_mode<synchronous>, transform_indices = @transform_6, window_bounds = array<i64: 1, 128>}, {transform_indices = @transform_7, window_bounds = array<i64: 16, 128>}]} {
    %c0 = arith.constant 0 : index
    %c0_0 = arith.constant 0 : index
    %0 = vector.load %arg1[%c0, %c0_0] : memref<16x128xbf16, #tpu.memory_space<vmem>>, vector<16x128xbf16>
    %c0_1 = arith.constant 0 : index
    %c0_2 = arith.constant 0 : index
    %1 = vector.load %arg2[%c0_1, %c0_2] : memref<128x128xbf16, #tpu.memory_space<vmem>>, vector<128x128xbf16>
    %cst = arith.constant dense<0.000000e+00> : vector<16x128xf32>
    %2 = tpu.matmul %0, %1, %cst {dimension_numbers = #tpu.dot_dimension_numbers<[1], [0], [0], [1], [0, 0, 1, 1], [], []>} : vector<16x128xbf16>, vector<128x128xbf16>, vector<16x128xf32> -> vector<16x128xf32>
    %c0_3 = arith.constant 0 : index
    %c0_4 = arith.constant 0 : index
    %3 = vector.load %arg3[%c0_3, %c0_4] : memref<1x128xf32, #tpu.memory_space<vmem>>, vector<1x128xf32>
    %4 = vector.broadcast %3 : vector<1x128xf32> to vector<16x128xf32>
    %5 = arith.addf %2, %4 : vector<16x128xf32>
    %cst_5 = arith.constant 0.000000e+00 : f32
    %6 = vector.broadcast %cst_5 : f32 to vector<16x128xf32>
    %7 = arith.maximumf %5, %6 : vector<16x128xf32>
    %8 = arith.truncf %7 : vector<16x128xf32> to vector<16x128xbf16>
    %c0_6 = arith.constant 0 : index
    %c0_7 = arith.constant 0 : index
    %9 = vector.load %arg4[%c0_6, %c0_7] : memref<128x128xbf16, #tpu.memory_space<vmem>>, vector<128x128xbf16>
    %cst_8 = arith.constant dense<0.000000e+00> : vector<16x128xf32>
    %10 = tpu.matmul %8, %9, %cst_8 {dimension_numbers = #tpu.dot_dimension_numbers<[1], [0], [0], [1], [0, 0, 1, 1], [], []>} : vector<16x128xbf16>, vector<128x128xbf16>, vector<16x128xf32> -> vector<16x128xf32>
    %c0_9 = arith.constant 0 : index
    %c0_10 = arith.constant 0 : index
    %11 = vector.load %arg5[%c0_9, %c0_10] : memref<1x128xf32, #tpu.memory_space<vmem>>, vector<1x128xf32>
    %12 = vector.broadcast %11 : vector<1x128xf32> to vector<16x128xf32>
    %13 = arith.addf %10, %12 : vector<16x128xf32>
    %cst_11 = arith.constant 0.000000e+00 : f32
    %14 = vector.broadcast %cst_11 : f32 to vector<16x128xf32>
    %15 = arith.maximumf %13, %14 : vector<16x128xf32>
    %16 = arith.truncf %15 : vector<16x128xf32> to vector<16x128xbf16>
    %c0_12 = arith.constant 0 : index
    %c0_13 = arith.constant 0 : index
    %17 = vector.load %arg6[%c0_12, %c0_13] : memref<128x128xbf16, #tpu.memory_space<vmem>>, vector<128x128xbf16>
    %cst_14 = arith.constant dense<0.000000e+00> : vector<16x128xf32>
    %18 = tpu.matmul %16, %17, %cst_14 {dimension_numbers = #tpu.dot_dimension_numbers<[1], [0], [0], [1], [0, 0, 1, 1], [], []>} : vector<16x128xbf16>, vector<128x128xbf16>, vector<16x128xf32> -> vector<16x128xf32>
    %c0_15 = arith.constant 0 : index
    %c0_16 = arith.constant 0 : index
    %19 = vector.load %arg7[%c0_15, %c0_16] : memref<1x128xf32, #tpu.memory_space<vmem>>, vector<1x128xf32>
    %20 = vector.broadcast %19 : vector<1x128xf32> to vector<16x128xf32>
    %21 = arith.addf %18, %20 : vector<16x128xf32>
    %c0_17 = arith.constant 0 : index
    %c0_18 = arith.constant 0 : index
    %22 = vector.load %arg8[%c0_17, %c0_18] : memref<16x128xf32, #tpu.memory_space<vmem>>, vector<16x128xf32>
    tpu.vector_store %arg8[%c0_17, %c0_18], %21 {strides = array<i32>} : memref<16x128xf32, #tpu.memory_space<vmem>>, vector<16x128xf32>,
    return
  }
  func.func @transform_0(%arg0: i32) -> (i32, i32) {
    %c0_i32 = arith.constant 0 : i32
    %c0_i32_0 = arith.constant 0 : i32
    return %arg0, %c0_i32 : i32, i32
  }
  func.func @transform_1(%arg0: i32) -> (i32, i32) {
    %c0_i32 = arith.constant 0 : i32
    %c0_i32_0 = arith.constant 0 : i32
    %c0_i32_1 = arith.constant 0 : i32
    return %c0_i32, %c0_i32_0 : i32, i32
  }
  func.func @transform_2(%arg0: i32) -> (i32, i32) {
    %c0_i32 = arith.constant 0 : i32
    %c0_i32_0 = arith.constant 0 : i32
    %c0_i32_1 = arith.constant 0 : i32
    return %c0_i32, %c0_i32_0 : i32, i32
  }
  func.func @transform_3(%arg0: i32) -> (i32, i32) {
    %c0_i32 = arith.constant 0 : i32
    %c0_i32_0 = arith.constant 0 : i32
    %c0_i32_1 = arith.constant 0 : i32
    return %c0_i32, %c0_i32_0 : i32, i32
  }
  func.func @transform_4(%arg0: i32) -> (i32, i32) {
    %c0_i32 = arith.constant 0 : i32
    %c0_i32_0 = arith.constant 0 : i32
    %c0_i32_1 = arith.constant 0 : i32
    return %c0_i32, %c0_i32_0 : i32, i32
  }
  func.func @transform_5(%arg0: i32) -> (i32, i32) {
    %c0_i32 = arith.constant 0 : i32
    %c0_i32_0 = arith.constant 0 : i32
    %c0_i32_1 = arith.constant 0 : i32
    return %c0_i32, %c0_i32_0 : i32, i32
  }
  func.func @transform_6(%arg0: i32) -> (i32, i32) {
    %c0_i32 = arith.constant 0 : i32
    %c0_i32_0 = arith.constant 0 : i32
    %c0_i32_1 = arith.constant 0 : i32
    return %c0_i32, %c0_i32_0 : i32, i32
  }
  func.func @transform_7(%arg0: i32) -> (i32, i32) {
    %c0_i32 = arith.constant 0 : i32
    %c0_i32_0 = arith.constant 0 : i32
    return %arg0, %c0_i32 : i32, i32
  }
}

</mosaic_0001>

<llo_original>
// kernel: mlp_forward.1
$region0: #{mlp_forward.1}
  #allocation0 [shape = 'u32[]', space=smem, size = 0x4, offset = 0x4, fixed_abs, tag = 'smem constant byte address 0x4 - core index']
  #allocation1 [shape = 'u32[144,128]{1,0:T(1,128)}', space=vmem, size = 0x12000, scoped, tag = 'internal scratch']
  %s0 = inlined_call_operand.vmem [shape: bf16[16,128], index: 0, kind: input, shape index: {}]
  %s1 = inlined_call_operand.hbm [shape: bf16[128,128], index: 1, kind: input, shape index: {}]
  %s2 = inlined_call_operand.vmem [shape: f32[1,128], index: 2, kind: input, shape index: {}]
  %s3 = inlined_call_operand.hbm [shape: bf16[128,128], index: 3, kind: input, shape index: {}]
  %s4 = inlined_call_operand.vmem [shape: f32[1,128], index: 4, kind: input, shape index: {}]
  %s5 = inlined_call_operand.hbm [shape: bf16[128,128], index: 5, kind: input, shape index: {}]
  %s6 = inlined_call_operand.vmem [shape: f32[1,128], index: 6, kind: input, shape index: {}]
  %s7 = inlined_call_operand.vmem [shape: f32[16,128], index: 7, kind: output, shape index: {}]
  %s8 = sld [smem:[#allocation0]]
  $region50: #{mlp_forward.1} parent=0
    _
  %s10 = ssub.s32 1, %s8
  %s11 = scalar_select 0, %s10, %s8
  $region1: #{mlp_forward.1} parent=0
    #allocation2 [shape = 'u8[32768]{0}', space=vmem, size = 0x8000, scoped, tag = 'input window, operand 1, single buffered']
    #allocation3 [shape = 's32[1]{0}', space=sflag, size = 0x4, scoped, tag = 'scoped memory for mlp_forward.1']
    #allocation4 [shape = 'u8[32768]{0}', space=vmem, size = 0x8000, scoped, tag = 'input window, operand 3, single buffered']
    #allocation5 [shape = 's32[1]{0}', space=sflag, size = 0x4, scoped, tag = 'scoped memory for mlp_forward.1']
    #allocation6 [shape = 'u8[32768]{0}', space=vmem, size = 0x8000, scoped, tag = 'input window, operand 5, single buffered']
    %12 = vsyncpa [#allocation3], 0
    %13 = vsyncpa [#allocation5], 0
    // Predicated region
    $region2: #{mlp_forward.1} parent=1 // pred_check
      _
    $region3: #{mlp_forward.1} parent=1 // pred_check_branch
      %15 = sbr.rel (0) target = $region5
    $region4: #{mlp_forward.1} parent=1 // pred_region
      _
    $region5: #{mlp_forward.1} parent=1 // pred_fallthru
      _
    // Predicated region
    $region6: #{mlp_forward.1} parent=1 // pred_check
      _
    $region7: #{mlp_forward.1} parent=1 // pred_check_branch
      %17 = sbr.rel (0) target = $region9
    $region8: #{mlp_forward.1} parent=1 // pred_region
      %s19 = ssub.s32 1024, 1024
      %20 = vsyncadd [#allocation3], %s19
      %s21 = sshll.u32 [#allocation2], 4
      %s22 = int_to_ptr.vmem [resolvable:$true] %s21
      %27 = dma.hbm_to_vmem [thread:$0]  %s1, 1024, %s22, [#allocation3], 64, 64, 4
    $region9: #{mlp_forward.1} parent=1 // pred_fallthru
      _
    // Predicated region
    $region10: #{mlp_forward.1} parent=1 // pred_check
      _
    $region11: #{mlp_forward.1} parent=1 // pred_check_branch
      %29 = sbr.rel (0) target = $region13
    $region12: #{mlp_forward.1} parent=1 // pred_region
      _
    $region13: #{mlp_forward.1} parent=1 // pred_fallthru
      _
    // Predicated region
    $region14: #{mlp_forward.1} parent=1 // pred_check
      _
    $region15: #{mlp_forward.1} parent=1 // pred_check_branch
      %31 = sbr.rel (0) target = $region17
    $region16: #{mlp_forward.1} parent=1 // pred_region
      %s33 = ssub.s32 1024, 1024
      %34 = vsyncadd [#allocation5], %s33
      %s35 = sshll.u32 [#allocation4], 4
      %s36 = int_to_ptr.vmem [resolvable:$true] %s35
      %41 = dma.hbm_to_vmem [thread:$0]  %s3, 1024, %s36, [#allocation5], 64, 64, 4
    $region17: #{mlp_forward.1} parent=1 // pred_fallthru
      _
    // Predicated region
    $region18: #{mlp_forward.1} parent=1 // pred_check
      _
    $region19: #{mlp_forward.1} parent=1 // pred_check_branch
      %43 = sbr.rel (0) target = $region21
    $region20: #{mlp_forward.1} parent=1 // pred_region
      _
    $region21: #{mlp_forward.1} parent=1 // pred_fallthru
      _
    // Predicated region
    $region22: #{mlp_forward.1} parent=1 // pred_check
      _
    $region23: #{mlp_forward.1} parent=1 // pred_check_branch
      %45 = sbr.rel (0) target = $region25
    $region24: #{mlp_forward.1} parent=1 // pred_region
      %s47 = ssub.s32 1024, 1024
      %48 = vsyncadd [#allocation5], %s47
      %s49 = sshll.u32 [#allocation6], 4
      %s50 = int_to_ptr.vmem [resolvable:$true] %s49
      %55 = dma.hbm_to_vmem [thread:$0]  %s5, 1024, %s50, [#allocation5], 64, 64, 4
    $region25: #{mlp_forward.1} parent=1 // pred_fallthru
      _
    // Predicated region
    $region26: #{mlp_forward.1} parent=1 // pred_check
      _
    $region27: #{mlp_forward.1} parent=1 // pred_check_branch
      %57 = sbr.rel (0) target = $region29
    $region28: #{mlp_forward.1} parent=1 // pred_region
      _
    $region29: #{mlp_forward.1} parent=1 // pred_fallthru
      _
    // Predicated region
    $region30: #{mlp_forward.1} parent=1 // pred_check
      _
    $region31: #{mlp_forward.1} parent=1 // pred_check_branch
      %59 = sbr.rel (0) target = $region33
    $region32: #{mlp_forward.1} parent=1 // pred_region
      %60 = dma.done [#allocation3], 1024
    $region33: #{mlp_forward.1} parent=1 // pred_fallthru
      _
    // Predicated region
    $region34: #{mlp_forward.1} parent=1 // pred_check
      _
    $region35: #{mlp_forward.1} parent=1 // pred_check_branch
      %62 = sbr.rel (0) target = $region37
    $region36: #{mlp_forward.1} parent=1 // pred_region
      %63 = dma.done [#allocation5], 1024
    $region37: #{mlp_forward.1} parent=1 // pred_fallthru
      _
    // Predicated region
    $region38: #{mlp_forward.1} parent=1 // pred_check
      _
    $region39: #{mlp_forward.1} parent=1 // pred_check_branch
      %65 = sbr.rel (0) target = $region41
    $region40: #{mlp_forward.1} parent=1 // pred_region
      %66 = dma.done [#allocation5], 1024
    $region41: #{mlp_forward.1} parent=1 // pred_fallthru
      _
    %v68 = vld [vmem:[%s0] sm:$0xf]
    %v69 = vld [vmem:[%s0 + $0x4] sm:$0xf]
    %v70 = vld [vmem:[#allocation2] sm:$0xf]
    %v71 = vld [vmem:[#allocation2 + $0x4] sm:$0xf]
    %v72 = vld [vmem:[#allocation2 + $0x8] sm:$0xf]
    %v73 = vld [vmem:[#allocation2 + $0xc] sm:$0xf]
    %v74 = vld [vmem:[#allocation2 + $0x10] sm:$0xf]
    %v75 = vld [vmem:[#allocation2 + $0x14] sm:$0xf]
    %v76 = vld [vmem:[#allocation2 + $0x18] sm:$0xf]
    %v77 = vld [vmem:[#allocation2 + $0x1c] sm:$0xf]
    %v78 = vld [vmem:[#allocation2 + $0x20] sm:$0xf]
    %v79 = vld [vmem:[#allocation2 + $0x24] sm:$0xf]
    %v80 = vld [vmem:[#allocation2 + $0x28] sm:$0xf]
    %v81 = vld [vmem:[#allocation2 + $0x2c] sm:$0xf]
    %v82 = vld [vmem:[#allocation2 + $0x30] sm:$0xf]
    %v83 = vld [vmem:[#allocation2 + $0x34] sm:$0xf]
    %v84 = vld [vmem:[#allocation2 + $0x38] sm:$0xf]
    %v85 = vld [vmem:[#allocation2 + $0x3c] sm:$0xf]
    %v86 = vld [vmem:[%s2] sm:$0x1]
    %v88 = vlaneseq
    %v89 = vshrl.u32 %v88, 7
    %v90 = vsub.s32 0, %v89
    %v91 = vrot.slane %v86, %v90
    %v95 = vunpack.c.l.b16 %v68
    %v96 = vunpack.c.l.b16 %v69
    %v97 = vpack.c.b16 %v96, %v95
    %v115 = vunpack.c.l.b16 %v70
    %v116 = vunpack.c.l.b16 %v71
    %v117 = vunpack.c.l.b16 %v72
    %v118 = vunpack.c.l.b16 %v73
    %v119 = vunpack.c.l.b16 %v74
    %v120 = vunpack.c.l.b16 %v75
    %v121 = vunpack.c.l.b16 %v76
    %v122 = vunpack.c.l.b16 %v77
    %v123 = vunpack.c.l.b16 %v78
    %v124 = vunpack.c.l.b16 %v79
    %v125 = vunpack.c.l.b16 %v80
    %v126 = vunpack.c.l.b16 %v81
    %v127 = vunpack.c.l.b16 %v82
    %v128 = vunpack.c.l.b16 %v83
    %v129 = vunpack.c.l.b16 %v84
    %v130 = vunpack.c.l.b16 %v85
    %v131 = vpack.c.b16 %v116, %v115
    %v132 = vpack.c.b16 %v118, %v117
    %v133 = vpack.c.b16 %v120, %v119
    %v134 = vpack.c.b16 %v122, %v121
    %v135 = vpack.c.b16 %v124, %v123
    %v136 = vpack.c.b16 %v126, %v125
    %v137 = vpack.c.b16 %v128, %v127
    %v138 = vpack.c.b16 %v130, %v129
    %147 = vmatprep.subr.bf16.mxu0 0
    %148 = vmatpush1.bf16.msra.mxu0 %v131
    %149 = vmatprep.subr.bf16.mxu0 0
    %150 = vmatpush1.bf16.msra.mxu0 %v132
    %151 = vmatprep.subr.bf16.mxu0 0
    %152 = vmatpush1.bf16.msra.mxu0 %v133
    %153 = vmatprep.subr.bf16.mxu0 0
    %154 = vmatpush1.bf16.msra.mxu0 %v134
    %155 = vmatprep.subr.bf16.mxu0 0
    %156 = vmatpush1.bf16.msra.mxu0 %v135
    %157 = vmatprep.subr.bf16.mxu0 0
    %158 = vmatpush1.bf16.msra.mxu0 %v136
    %159 = vmatprep.subr.bf16.mxu0 0
    %160 = vmatpush1.bf16.msra.mxu0 %v137
    %161 = vmatprep.subr.bf16.mxu0 0
    %162 = vmatpush1.bf16.msra.mxu0 %v138
    %163 = vmatprep.subr.bf16.mxu0 0
    %164 = vmatpush1.bf16.msra.mxu0 0
    %165 = vmatprep.subr.bf16.mxu0 0
    %166 = vmatpush1.bf16.msra.mxu0 0
    %167 = vmatprep.subr.bf16.mxu0 0
    %168 = vmatpush1.bf16.msra.mxu0 0
    %169 = vmatprep.subr.bf16.mxu0 0
    %170 = vmatpush1.bf16.msra.mxu0 0
    %171 = vmatprep.subr.bf16.mxu0 0
    %172 = vmatpush1.bf16.msra.mxu0 0
    %173 = vmatprep.subr.bf16.mxu0 0
    %174 = vmatpush1.bf16.msra.mxu0 0
    %175 = vmatprep.subr.bf16.mxu0 0
    %176 = vmatpush1.bf16.msra.mxu0 0
    %177 = vmatprep.subr.bf16.mxu0 0
    %178 = vmatpush1.bf16.msra.mxu0 0
    %179 = vmatprep.mubr.bf16.mxu0 0
    %180 = vmatmul.mubr.bf16.gmra.mrb[0].mxu0 %v97
    %v181 = vpop.f32.mrb[0].mxu0
    %v182 = vadd.f32 %v91, %v181
    %v183 = vpop.f32.mrb[0].mxu0
    %v184 = vpop.f32.mrb[0].mxu0
    %v185 = vadd.f32 %v91, %v184
    %v186 = vpop.f32.mrb[0].mxu0
    %187 = vdwg.mxu0
    %v188 = vmax.f32 %v182, 0.0
    %v189 = vmax.f32 %v185, 0.0
    %v190 = vpack.c.bf16 %v189, %v188
    %v191 = vld [vmem:[#allocation4] sm:$0xf]
    %v192 = vld [vmem:[#allocation4 + $0x4] sm:$0xf]
    %v193 = vld [vmem:[#allocation4 + $0x8] sm:$0xf]
    %v194 = vld [vmem:[#allocation4 + $0xc] sm:$0xf]
    %v195 = vld [vmem:[#allocation4 + $0x10] sm:$0xf]
    %v196 = vld [vmem:[#allocation4 + $0x14] sm:$0xf]
    %v197 = vld [vmem:[#allocation4 + $0x18] sm:$0xf]
    %v198 = vld [vmem:[#allocation4 + $0x1c] sm:$0xf]
    %v199 = vld [vmem:[#allocation4 + $0x20] sm:$0xf]
    %v200 = vld [vmem:[#allocation4 + $0x24] sm:$0xf]
    %v201 = vld [vmem:[#allocation4 + $0x28] sm:$0xf]
    %v202 = vld [vmem:[#allocation4 + $0x2c] sm:$0xf]
    %v203 = vld [vmem:[#allocation4 + $0x30] sm:$0xf]
    %v204 = vld [vmem:[#allocation4 + $0x34] sm:$0xf]
    %v205 = vld [vmem:[#allocation4 + $0x38] sm:$0xf]
    %v206 = vld [vmem:[#allocation4 + $0x3c] sm:$0xf]
    %v207 = vld [vmem:[%s4] sm:$0x1]
    %v209 = vlaneseq
    %v210 = vshrl.u32 %v209, 7
    %v211 = vsub.s32 0, %v210
    %v212 = vrot.slane %v207, %v211
    %v230 = vunpack.c.l.b16 %v191
    %v231 = vunpack.c.l.b16 %v192
    %v232 = vunpack.c.l.b16 %v193
    %v233 = vunpack.c.l.b16 %v194
    %v234 = vunpack.c.l.b16 %v195
    %v235 = vunpack.c.l.b16 %v196
    %v236 = vunpack.c.l.b16 %v197
    %v237 = vunpack.c.l.b16 %v198
    %v238 = vunpack.c.l.b16 %v199
    %v239 = vunpack.c.l.b16 %v200
    %v240 = vunpack.c.l.b16 %v201
    %v241 = vunpack.c.l.b16 %v202
    %v242 = vunpack.c.l.b16 %v203
    %v243 = vunpack.c.l.b16 %v204
    %v244 = vunpack.c.l.b16 %v205
    %v245 = vunpack.c.l.b16 %v206
    %v246 = vpack.c.b16 %v231, %v230
    %v247 = vpack.c.b16 %v233, %v232
    %v248 = vpack.c.b16 %v235, %v234
    %v249 = vpack.c.b16 %v237, %v236
    %v250 = vpack.c.b16 %v239, %v238
    %v251 = vpack.c.b16 %v241, %v240
    %v252 = vpack.c.b16 %v243, %v242
    %v253 = vpack.c.b16 %v245, %v244
    %262 = vmatprep.subr.bf16.mxu0 0
    %263 = vmatpush1.bf16.msra.mxu0 %v246
    %264 = vmatprep.subr.bf16.mxu0 0
    %265 = vmatpush1.bf16.msra.mxu0 %v247
    %266 = vmatprep.subr.bf16.mxu0 0
    %267 = vmatpush1.bf16.msra.mxu0 %v248
    %268 = vmatprep.subr.bf16.mxu0 0
    %269 = vmatpush1.bf16.msra.mxu0 %v249
    %270 = vmatprep.subr.bf16.mxu0 0
    %271 = vmatpush1.bf16.msra.mxu0 %v250
    %272 = vmatprep.subr.bf16.mxu0 0
    %273 = vmatpush1.bf16.msra.mxu0 %v251
    %274 = vmatprep.subr.bf16.mxu0 0
    %275 = vmatpush1.bf16.msra.mxu0 %v252
    %276 = vmatprep.subr.bf16.mxu0 0
    %277 = vmatpush1.bf16.msra.mxu0 %v253
    %278 = vmatprep.subr.bf16.mxu0 0
    %279 = vmatpush1.bf16.msra.mxu0 0
    %280 = vmatprep.subr.bf16.mxu0 0
    %281 = vmatpush1.bf16.msra.mxu0 0
    %282 = vmatprep.subr.bf16.mxu0 0
    %283 = vmatpush1.bf16.msra.mxu0 0
    %284 = vmatprep.subr.bf16.mxu0 0
    %285 = vmatpush1.bf16.msra.mxu0 0
    %286 = vmatprep.subr.bf16.mxu0 0
    %287 = vmatpush1.bf16.msra.mxu0 0
    %288 = vmatprep.subr.bf16.mxu0 0
    %289 = vmatpush1.bf16.msra.mxu0 0
    %290 = vmatprep.subr.bf16.mxu0 0
    %291 = vmatpush1.bf16.msra.mxu0 0
    %292 = vmatprep.subr.bf16.mxu0 0
    %293 = vmatpush1.bf16.msra.mxu0 0
    %294 = vmatprep.mubr.bf16.mxu0 0
    %295 = vmatmul.mubr.bf16.gmra.mrb[0].mxu0 %v190
    %v296 = vpop.f32.mrb[0].mxu0
    %v297 = vadd.f32 %v212, %v296
    %v298 = vpop.f32.mrb[0].mxu0
    %v299 = vpop.f32.mrb[0].mxu0
    %v300 = vadd.f32 %v212, %v299
    %v301 = vpop.f32.mrb[0].mxu0
    %302 = vdwg.mxu0
    %v303 = vmax.f32 %v297, 0.0
    %v304 = vmax.f32 %v300, 0.0
    %v305 = vpack.c.bf16 %v304, %v303
    %v306 = vld [vmem:[#allocation6] sm:$0xf]
    %v307 = vld [vmem:[#allocation6 + $0x4] sm:$0xf]
    %v308 = vld [vmem:[#allocation6 + $0x8] sm:$0xf]
    %v309 = vld [vmem:[#allocation6 + $0xc] sm:$0xf]
    %v310 = vld [vmem:[#allocation6 + $0x10] sm:$0xf]
    %v311 = vld [vmem:[#allocation6 + $0x14] sm:$0xf]
    %v312 = vld [vmem:[#allocation6 + $0x18] sm:$0xf]
    %v313 = vld [vmem:[#allocation6 + $0x1c] sm:$0xf]
    %v314 = vld [vmem:[#allocation6 + $0x20] sm:$0xf]
    %v315 = vld [vmem:[#allocation6 + $0x24] sm:$0xf]
    %v316 = vld [vmem:[#allocation6 + $0x28] sm:$0xf]
    %v317 = vld [vmem:[#allocation6 + $0x2c] sm:$0xf]
    %v318 = vld [vmem:[#allocation6 + $0x30] sm:$0xf]
    %v319 = vld [vmem:[#allocation6 + $0x34] sm:$0xf]
    %v320 = vld [vmem:[#allocation6 + $0x38] sm:$0xf]
    %v321 = vld [vmem:[#allocation6 + $0x3c] sm:$0xf]
    %v322 = vld [vmem:[%s6] sm:$0x1]
    %v324 = vlaneseq
    %v325 = vshrl.u32 %v324, 7
    %v326 = vsub.s32 0, %v325
    %v327 = vrot.slane %v322, %v326
    %v345 = vunpack.c.l.b16 %v306
    %v346 = vunpack.c.l.b16 %v307
    %v347 = vunpack.c.l.b16 %v308
    %v348 = vunpack.c.l.b16 %v309
    %v349 = vunpack.c.l.b16 %v310
    %v350 = vunpack.c.l.b16 %v311
    %v351 = vunpack.c.l.b16 %v312
    %v352 = vunpack.c.l.b16 %v313
    %v353 = vunpack.c.l.b16 %v314
    %v354 = vunpack.c.l.b16 %v315
    %v355 = vunpack.c.l.b16 %v316
    %v356 = vunpack.c.l.b16 %v317
    %v357 = vunpack.c.l.b16 %v318
    %v358 = vunpack.c.l.b16 %v319
    %v359 = vunpack.c.l.b16 %v320
    %v360 = vunpack.c.l.b16 %v321
    %v361 = vpack.c.b16 %v346, %v345
    %v362 = vpack.c.b16 %v348, %v347
    %v363 = vpack.c.b16 %v350, %v349
    %v364 = vpack.c.b16 %v352, %v351
    %v365 = vpack.c.b16 %v354, %v353
    %v366 = vpack.c.b16 %v356, %v355
    %v367 = vpack.c.b16 %v358, %v357
    %v368 = vpack.c.b16 %v360, %v359
    %377 = vmatprep.subr.bf16.mxu0 0
    %378 = vmatpush1.bf16.msra.mxu0 %v361
    %379 = vmatprep.subr.bf16.mxu0 0
    %380 = vmatpush1.bf16.msra.mxu0 %v362
    %381 = vmatprep.subr.bf16.mxu0 0
    %382 = vmatpush1.bf16.msra.mxu0 %v363
    %383 = vmatprep.subr.bf16.mxu0 0
    %384 = vmatpush1.bf16.msra.mxu0 %v364
    %385 = vmatprep.subr.bf16.mxu0 0
    %386 = vmatpush1.bf16.msra.mxu0 %v365
    %387 = vmatprep.subr.bf16.mxu0 0
    %388 = vmatpush1.bf16.msra.mxu0 %v366
    %389 = vmatprep.subr.bf16.mxu0 0
    %390 = vmatpush1.bf16.msra.mxu0 %v367
    %391 = vmatprep.subr.bf16.mxu0 0
    %392 = vmatpush1.bf16.msra.mxu0 %v368
    %393 = vmatprep.subr.bf16.mxu0 0
    %394 = vmatpush1.bf16.msra.mxu0 0
    %395 = vmatprep.subr.bf16.mxu0 0
    %396 = vmatpush1.bf16.msra.mxu0 0
    %397 = vmatprep.subr.bf16.mxu0 0
    %398 = vmatpush1.bf16.msra.mxu0 0
    %399 = vmatprep.subr.bf16.mxu0 0
    %400 = vmatpush1.bf16.msra.mxu0 0
    %401 = vmatprep.subr.bf16.mxu0 0
    %402 = vmatpush1.bf16.msra.mxu0 0
    %403 = vmatprep.subr.bf16.mxu0 0
    %404 = vmatpush1.bf16.msra.mxu0 0
    %405 = vmatprep.subr.bf16.mxu0 0
    %406 = vmatpush1.bf16.msra.mxu0 0
    %407 = vmatprep.subr.bf16.mxu0 0
    %408 = vmatpush1.bf16.msra.mxu0 0
    %409 = vmatprep.mubr.bf16.mxu0 0
    %410 = vmatmul.mubr.bf16.gmra.mrb[0].mxu0 %v305
    %v411 = vpop.f32.mrb[0].mxu0
    %v412 = vadd.f32 %v327, %v411
    %v413 = vpop.f32.mrb[0].mxu0
    %v414 = vpop.f32.mrb[0].mxu0
    %v415 = vadd.f32 %v327, %v414
    %v416 = vpop.f32.mrb[0].mxu0
    %417 = vdwg.mxu0
    %418 = vst [vmem:[%s7] sm:$0xff] %v412
    %419 = vst [vmem:[%s7 + $0x8] sm:$0xff] %v415
    // Predicated region
    $region42: #{mlp_forward.1} parent=1 // pred_check
      _
    $region43: #{mlp_forward.1} parent=1 // pred_check_branch
      %421 = sbr.rel (0) target = $region45
    $region44: #{mlp_forward.1} parent=1 // pred_region
      _
    $region45: #{mlp_forward.1} parent=1 // pred_fallthru
      _
    // Predicated region
    $region46: #{mlp_forward.1} parent=1 // pred_check
      _
    $region47: #{mlp_forward.1} parent=1 // pred_check_branch
      %423 = sbr.rel (0) target = $region49
    $region48: #{mlp_forward.1} parent=1 // pred_region
      _
    $region49: #{mlp_forward.1} parent=1 // pred_fallthru
      _
    %424 = vsyncpa [#allocation3], 1
    %425 = vsyncpa [#allocation5], 1

</llo_original>
